<compile_context>
chip_gen: v7x
topology: tpu7x:2x2x1
jax: 0.10.0
libtpu: 0.0.40
codegen_flags: <defaults>
</compile_context>

<pallas_src>
import jax
import jax.numpy as jnp
from jax import lax
from jax.experimental import pallas as pl
from jax.experimental.pallas import tpu as pltpu

_EPS = 1e-5


def _mlp_byol_kernel(x_ref, w1_ref, bn_ref, w2_ref, b2_ref, o_ref,
                     h_ref, stats_ref):
    """Two-phase, batch-tiled forward.  grid = (2, n_batch_tiles)."""
    p = pl.program_id(0)          # phase: 0 = matmul1 + stats, 1 = BN/ReLU/matmul2
    i = pl.program_id(1)          # batch tile
    block_m = x_ref.shape[0]
    batch = h_ref.shape[0]
    row = pl.multiple_of(i * block_m, block_m)

    @pl.when(p == 0)
    def _phase0():
        @pl.when(i == 0)
        def _init():
            stats_ref[...] = jnp.zeros_like(stats_ref)

        # Linear 1 on the MXU; bf16 operands cast in-kernel (VPU slack), f32 acc.
        # Linear1's bias is omitted: train-mode BN's mean subtraction cancels it.
        h = jnp.dot(x_ref[...].astype(jnp.bfloat16),
                    w1_ref[...].astype(jnp.bfloat16),
                    preferred_element_type=jnp.float32)
        h_ref[pl.ds(row, block_m), :] = h
        stats_ref[0:1, :] += jnp.sum(h, axis=0, keepdims=True)

    @pl.when(p == 1)
    def _phase1():
        @pl.when(i == 0)
        def _finalize_stats():
            inv_b = 1.0 / batch
            mean = stats_ref[0:1, :] * inv_b                       # (1, hid)
            # Exact two-pass (centered) biased variance over resident h scratch.
            var = jnp.sum((h_ref[...] - mean) ** 2,
                          axis=0, keepdims=True) * inv_b           # (1, hid)
            scale = bn_ref[0:1, :] * lax.rsqrt(var + _EPS)         # gamma * rsqrt
            shift = bn_ref[1:2, :] - mean * scale                  # beta - mean*scale
            stats_ref[0:1, :] = scale
            stats_ref[1:2, :] = shift

        h = h_ref[pl.ds(row, block_m), :]
        # Fused BN scale/shift + ReLU in f32 on the VPU.
        h = jnp.maximum(h * stats_ref[0:1, :] + stats_ref[1:2, :], 0.0)
        # Linear 2 on the MXU (bf16 operands, f32 accumulation) + bias.
        o_ref[...] = jnp.dot(h.astype(jnp.bfloat16),
                             w2_ref[...].astype(jnp.bfloat16),
                             preferred_element_type=jnp.float32) + b2_ref[...]


def prediction_mlp_byol(x, w1, b1, gamma, beta, w2, b2, *, block_m=None):
    """x: (B, C, H, W) float32 -> (B, out_dim) float32.

    b1 is accepted for API parity with nn.Linear but is mathematically a no-op
    under train-mode BatchNorm (batch statistics), so it is not passed to the
    kernel.  If this is ever reused with eval-mode running stats, b1 must be
    re-added.
    """
    del b1  # cancelled exactly by BN's batch-mean subtraction
    B = x.shape[0]
    x2 = x.reshape(B, -1)                      # torch.flatten(start_dim=1)
    in_dim = x2.shape[1]
    hidden_dim = w1.shape[1]
    out_dim = w2.shape[1]
    assert w1.shape == (in_dim, hidden_dim)
    assert w2.shape == (hidden_dim, out_dim)

    if block_m is None:
        block_m = B if B <= 128 else 128
    if block_m != B:
        assert B % block_m == 0 and block_m % 8 == 0, (
            "batch tiling requires B to be a multiple of an 8-aligned block_m")
    n_tiles = B // block_m

    # Single stacked (2, hidden) BN-param input; b2 as a (1, out) row.
    bn = jnp.stack([gamma, beta]).astype(jnp.float32)
    b2_2 = b2.reshape(1, out_dim).astype(jnp.float32)

    grid_spec = pltpu.PrefetchScalarGridSpec(
        num_scalar_prefetch=0,
        grid=(2, n_tiles),                         # (phase, batch tile)
        in_specs=[
            # x: stream batch tiles in phase 0; phase 1 pins block 0 (unused).
            pl.BlockSpec((block_m, in_dim), lambda p, i: (i * (1 - p), 0)),
            # Weights / params: constant index_map -> DMA'd once, resident.
            pl.BlockSpec((in_dim, hidden_dim), lambda p, i: (0, 0)),
            pl.BlockSpec((2, hidden_dim), lambda p, i: (0, 0)),
            pl.BlockSpec((hidden_dim, out_dim), lambda p, i: (0, 0)),
            pl.BlockSpec((1, out_dim), lambda p, i: (0, 0)),
        ],
        # Output blocks are only written in phase 1; p*i keeps the block index
        # pinned at 0 during phase 0 so no garbage tile is ever written back.
        out_specs=pl.BlockSpec((block_m, out_dim), lambda p, i: (p * i, 0)),
        scratch_shapes=[
            pltpu.VMEM((B, hidden_dim), jnp.float32),   # resident hidden activations
            pltpu.VMEM((2, hidden_dim), jnp.float32),   # sum(h) -> (scale, shift)
        ],
    )

    return pl.pallas_call(
        _mlp_byol_kernel,
        out_shape=jax.ShapeDtypeStruct((B, out_dim), jnp.float32),
        grid_spec=grid_spec,
        compiler_params=pltpu.CompilerParams(
            # Both axes sequential: batch tiles share the stats accumulator and
            # the resident h scratch (see TODO above for the megacore variant).
            dimension_semantics=("arbitrary", "arbitrary")),
    )(x2, w1, bn, w2, b2_2)


def _reference(x, w1, b1, gamma, beta, w2, b2):
    """Pure-JAX f32 reference matching the PyTorch module exactly."""
    B = x.shape[0]
    x2 = x.reshape(B, -1)
    h = x2 @ w1 + b1
    mean = h.mean(axis=0, keepdims=True)
    var = ((h - mean) ** 2).mean(axis=0, keepdims=True)   # biased, train mode
    h = (h - mean) / jnp.sqrt(var + 1e-5) * gamma + beta
    h = jnp.maximum(h, 0.0)
    return h @ w2 + b2


if __name__ == "__main__":
    # Small shapes consistent with the module: batch=16, C=4, H=W=8
    # -> in_dim = 4*8*8 = 256, hidden_dim = 128, out_dim = 256.
    # block_m=8 gives 2 batch tiles so the tiled stats-accumulation path runs.
    B, C, H, W = 16, 4, 8, 8
    in_dim, hidden_dim, out_dim = C * H * W, 128, 256

    key = jax.random.PRNGKey(0)
    kx, kw1, kb1, kw2, kb2, kg, kbt = jax.random.split(key, 7)

    x = jax.random.normal(kx, (B, C, H, W), dtype=jnp.float32)

    # Deterministic synthetic parameters (PyTorch-Linear-style uniform ranges).
    lim1 = 1.0 / jnp.sqrt(in_dim)
    w1 = jax.random.uniform(kw1, (in_dim, hidden_dim), jnp.float32, -lim1, lim1)
    b1 = jax.random.uniform(kb1, (hidden_dim,), jnp.float32, -lim1, lim1)
    lim2 = 1.0 / jnp.sqrt(hidden_dim)
    w2 = jax.random.uniform(kw2, (hidden_dim, out_dim), jnp.float32, -lim2, lim2)
    b2 = jax.random.uniform(kb2, (out_dim,), jnp.float32, -lim2, lim2)
    # Non-trivial affine BN params to exercise the scale/shift path.
    gamma = 1.0 + 0.1 * jax.random.normal(kg, (hidden_dim,), jnp.float32)
    beta = 0.1 * jax.random.normal(kbt, (hidden_dim,), jnp.float32)

    out = prediction_mlp_byol(x, w1, b1, gamma, beta, w2, b2, block_m=8)
    out = jax.block_until_ready(out)

    ref = _reference(x, w1, b1, gamma, beta, w2, b2)
    assert out.shape == (B, out_dim)
    # bf16 MXU operands (f32 accumulation / f32 BN math) loosen tolerance vs
    # the pure-f32 reference; outputs have O(0.5) magnitude so 2e-2 is safe.
    err = float(jnp.max(jnp.abs(out - ref)))
    assert jnp.allclose(out, ref, atol=2e-2, rtol=2e-2), f"mismatch vs reference ({err})"

    print("KERNEL_OK")
</pallas_src>

<mosaic_0001>
module attributes {stable_mosaic.version = 11 : i64} {
  func.func @_mlp_byol_kernel(%arg0: i32, %arg1: i32, %arg2: memref<8x256xf32, #tpu.memory_space<vmem>>, %arg3: memref<256x128xf32, #tpu.memory_space<vmem>>, %arg4: memref<2x128xf32, #tpu.memory_space<vmem>>, %arg5: memref<128x256xf32, #tpu.memory_space<vmem>>, %arg6: memref<1x256xf32, #tpu.memory_space<vmem>>, %arg7: memref<8x256xf32, #tpu.memory_space<vmem>>, %arg8: memref<16x128xf32, #tpu.memory_space<vmem>>, %arg9: memref<2x128xf32, #tpu.memory_space<vmem>>) attributes {dimension_semantics = [#tpu.dimension_semantics<arbitrary>, #tpu.dimension_semantics<arbitrary>], iteration_bounds = array<i64: 2, 2>, scalar_prefetch = 0 : i64, scratch_operands = 2 : i64, tpu.core_type = #tpu.core_type<tc>, window_params = [{transform_indices = @transform_0, window_bounds = array<i64: 8, 256>}, {pipeline_mode = #tpu.pipeline_mode<synchronous>, transform_indices = @transform_1, window_bounds = array<i64: 256, 128>}, {pipeline_mode = #tpu.pipeline_mode<synchronous>, transform_indices = @transform_2, window_bounds = array<i64: 2, 128>}, {pipeline_mode = #tpu.pipeline_mode<synchronous>, transform_indices = @transform_3, window_bounds = array<i64: 128, 256>}, {pipeline_mode = #tpu.pipeline_mode<synchronous>, transform_indices = @transform_4, window_bounds = array<i64: 1, 256>}, {transform_indices = @transform_5, window_bounds = array<i64: 8, 256>}]} {
    %c8_i32 = arith.constant 8 : i32
    %0 = arith.muli %arg1, %c8_i32 : i32
    %1 = tpu.assume_multiple %0, 8 : i32
    %c0_i32 = arith.constant 0 : i32
    %2 = arith.cmpi eq, %arg0, %c0_i32 : i32
    %3 = arith.extui %2 : i1 to i32
    %c0_i32_0 = arith.constant 0 : i32
    %4 = arith.cmpi ne, %3, %c0_i32_0 : i32
    scf.if %4 {
      %c0_i32_2 = arith.constant 0 : i32
      %8 = arith.cmpi eq, %arg1, %c0_i32_2 : i32
      %9 = arith.extui %8 : i1 to i32
      %c0_i32_3 = arith.constant 0 : i32
      %10 = arith.cmpi ne, %9, %c0_i32_3 : i32
      scf.if %10 {
        %cst_13 = arith.constant 0.000000e+00 : f32
        %23 = vector.broadcast %cst_13 : f32 to vector<2x128xf32>
        %c0_14 = arith.constant 0 : index
        %c0_15 = arith.constant 0 : index
        %24 = vector.load %arg9[%c0_14, %c0_15] : memref<2x128xf32, #tpu.memory_space<vmem>>, vector<2x128xf32>
        tpu.vector_store %arg9[%c0_14, %c0_15], %23 {strides = array<i32>} : memref<2x128xf32, #tpu.memory_space<vmem>>, vector<2x128xf32>,
      } else {
      }
      %c0 = arith.constant 0 : index
      %c0_4 = arith.constant 0 : index
      %11 = vector.load %arg2[%c0, %c0_4] : memref<8x256xf32, #tpu.memory_space<vmem>>, vector<8x256xf32>
      %12 = arith.truncf %11 : vector<8x256xf32> to vector<8x256xbf16>
      %c0_5 = arith.constant 0 : index
      %c0_6 = arith.constant 0 : index
      %13 = vector.load %arg3[%c0_5, %c0_6] : memref<256x128xf32, #tpu.memory_space<vmem>>, vector<256x128xf32>
      %14 = arith.truncf %13 : vector<256x128xf32> to vector<256x128xbf16>
      %cst = arith.constant dense<0.000000e+00> : vector<8x128xf32>
      %15 = tpu.matmul %12, %14, %cst {dimension_numbers = #tpu.dot_dimension_numbers<[1], [0], [0], [1], [0, 0, 1, 1], [], []>} : vector<8x256xbf16>, vector<256x128xbf16>, vector<8x128xf32> -> vector<8x128xf32>
      %16 = arith.index_cast %1 : i32 to index
      %c0_7 = arith.constant 0 : index
      %17 = vector.load %arg8[%16, %c0_7] : memref<16x128xf32, #tpu.memory_space<vmem>>, vector<8x128xf32>
      tpu.vector_store %arg8[%16, %c0_7], %15 {strides = array<i32>} : memref<16x128xf32, #tpu.memory_space<vmem>>, vector<8x128xf32>,
      %c0_8 = arith.constant 0 : index
      %c0_9 = arith.constant 0 : index
      %18 = vector.load %arg9[%c0_8, %c0_9] : memref<2x128xf32, #tpu.memory_space<vmem>>, vector<1x128xf32>
      %cst_10 = arith.constant dense<0.000000e+00> : vector<128xf32>
      %19 = vector.multi_reduction <add>, %15, %cst_10 [0] : vector<8x128xf32> to vector<128xf32>
      %20 = vector.shape_cast %19 : vector<128xf32> to vector<1x128xf32>
      %21 = arith.addf %18, %20 : vector<1x128xf32>
      %c0_11 = arith.constant 0 : index
      %c0_12 = arith.constant 0 : index
      %22 = vector.load %arg9[%c0_11, %c0_12] : memref<2x128xf32, #tpu.memory_space<vmem>>, vector<1x128xf32>
      tpu.vector_store %arg9[%c0_11, %c0_12], %21 {strides = array<i32>} : memref<2x128xf32, #tpu.memory_space<vmem>>, vector<1x128xf32>,
    } else {
    }
    %c1_i32 = arith.constant 1 : i32
    %5 = arith.cmpi eq, %arg0, %c1_i32 : i32
    %6 = arith.extui %5 : i1 to i32
    %c0_i32_1 = arith.constant 0 : i32
    %7 = arith.cmpi ne, %6, %c0_i32_1 : i32
    scf.if %7 {
      %c0_i32_2 = arith.constant 0 : i32
      %8 = arith.cmpi eq, %arg1, %c0_i32_2 : i32
      %9 = arith.extui %8 : i1 to i32
      %c0_i32_3 = arith.constant 0 : i32
      %10 = arith.cmpi ne, %9, %c0_i32_3 : i32
      scf.if %10 {
        %c0_14 = arith.constant 0 : index
        %c0_15 = arith.constant 0 : index
        %29 = vector.load %arg9[%c0_14, %c0_15] : memref<2x128xf32, #tpu.memory_space<vmem>>, vector<1x128xf32>
        %cst_16 = arith.constant 6.250000e-02 : f32
        %30 = vector.broadcast %cst_16 : f32 to vector<1x128xf32>
        %31 = arith.mulf %29, %30 : vector<1x128xf32>
        %c0_17 = arith.constant 0 : index
        %c0_18 = arith.constant 0 : index
        %32 = vector.load %arg8[%c0_17, %c0_18] : memref<16x128xf32, #tpu.memory_space<vmem>>, vector<16x128xf32>
        %33 = vector.broadcast %31 : vector<1x128xf32> to vector<16x128xf32>
        %34 = arith.subf %32, %33 : vector<16x128xf32>
        %35 = arith.mulf %34, %34 : vector<16x128xf32>
        %cst_19 = arith.constant dense<0.000000e+00> : vector<128xf32>
        %36 = vector.multi_reduction <add>, %35, %cst_19 [0] : vector<16x128xf32> to vector<128xf32>
        %37 = vector.shape_cast %36 : vector<128xf32> to vector<1x128xf32>
        %cst_20 = arith.constant 6.250000e-02 : f32
        %38 = vector.broadcast %cst_20 : f32 to vector<1x128xf32>
        %39 = arith.mulf %37, %38 : vector<1x128xf32>
        %c0_21 = arith.constant 0 : index
        %c0_22 = arith.constant 0 : index
        %40 = vector.load %arg4[%c0_21, %c0_22] : memref<2x128xf32, #tpu.memory_space<vmem>>, vector<1x128xf32>
        %cst_23 = arith.constant 9.99999974E-6 : f32
        %41 = vector.broadcast %cst_23 : f32 to vector<1x128xf32>
        %42 = arith.addf %39, %41 : vector<1x128xf32>
        %43 = math.rsqrt %42 : vector<1x128xf32>
        %44 = arith.mulf %40, %43 : vector<1x128xf32>
        %c1_24 = arith.constant 1 : index
        %c0_25 = arith.constant 0 : index
        %45 = vector.load %arg4[%c1_24, %c0_25] : memref<2x128xf32, #tpu.memory_space<vmem>>, vector<1x128xf32>
        %46 = arith.mulf %31, %44 : vector<1x128xf32>
        %47 = arith.subf %45, %46 : vector<1x128xf32>
        %c0_26 = arith.constant 0 : index
        %c0_27 = arith.constant 0 : index
        %48 = vector.load %arg9[%c0_26, %c0_27] : memref<2x128xf32, #tpu.memory_space<vmem>>, vector<1x128xf32>
        tpu.vector_store %arg9[%c0_26, %c0_27], %44 {strides = array<i32>} : memref<2x128xf32, #tpu.memory_space<vmem>>, vector<1x128xf32>,
        %c1_28 = arith.constant 1 : index
        %c0_29 = arith.constant 0 : index
        %49 = vector.load %arg9[%c1_28, %c0_29] : memref<2x128xf32, #tpu.memory_space<vmem>>, vector<1x128xf32>
        tpu.vector_store %arg9[%c1_28, %c0_29], %47 {strides = array<i32>} : memref<2x128xf32, #tpu.memory_space<vmem>>, vector<1x128xf32>,
      } else {
      }
      %11 = arith.index_cast %1 : i32 to index
      %c0 = arith.constant 0 : index
      %12 = vector.load %arg8[%11, %c0] : memref<16x128xf32, #tpu.memory_space<vmem>>, vector<8x128xf32>
      %c0_4 = arith.constant 0 : index
      %c0_5 = arith.constant 0 : index
      %13 = vector.load %arg9[%c0_4, %c0_5] : memref<2x128xf32, #tpu.memory_space<vmem>>, vector<1x128xf32>
      %14 = vector.broadcast %13 : vector<1x128xf32> to vector<8x128xf32>
      %15 = arith.mulf %12, %14 : vector<8x128xf32>
      %c1 = arith.constant 1 : index
      %c0_6 = arith.constant 0 : index
      %16 = vector.load %arg9[%c1, %c0_6] : memref<2x128xf32, #tpu.memory_space<vmem>>, vector<1x128xf32>
      %17 = vector.broadcast %16 : vector<1x128xf32> to vector<8x128xf32>
      %18 = arith.addf %15, %17 : vector<8x128xf32>
      %cst = arith.constant 0.000000e+00 : f32
      %19 = vector.broadcast %cst : f32 to vector<8x128xf32>
      %20 = arith.maximumf %18, %19 : vector<8x128xf32>
      %21 = arith.truncf %20 : vector<8x128xf32> to vector<8x128xbf16>
      %c0_7 = arith.constant 0 : index
      %c0_8 = arith.constant 0 : index
      %22 = vector.load %arg5[%c0_7, %c0_8] : memref<128x256xf32, #tpu.memory_space<vmem>>, vector<128x256xf32>
      %23 = arith.truncf %22 : vector<128x256xf32> to vector<128x256xbf16>
      %cst_9 = arith.constant dense<0.000000e+00> : vector<8x256xf32>
      %24 = tpu.matmul %21, %23, %cst_9 {dimension_numbers = #tpu.dot_dimension_numbers<[1], [0], [0], [1], [0, 0, 1, 1], [], []>} : vector<8x128xbf16>, vector<128x256xbf16>, vector<8x256xf32> -> vector<8x256xf32>
      %c0_10 = arith.constant 0 : index
      %c0_11 = arith.constant 0 : index
      %25 = vector.load %arg6[%c0_10, %c0_11] : memref<1x256xf32, #tpu.memory_space<vmem>>, vector<1x256xf32>
      %26 = vector.broadcast %25 : vector<1x256xf32> to vector<8x256xf32>
      %27 = arith.addf %24, %26 : vector<8x256xf32>
      %c0_12 = arith.constant 0 : index
      %c0_13 = arith.constant 0 : index
      %28 = vector.load %arg7[%c0_12, %c0_13] : memref<8x256xf32, #tpu.memory_space<vmem>>, vector<8x256xf32>
      tpu.vector_store %arg7[%c0_12, %c0_13], %27 {strides = array<i32>} : memref<8x256xf32, #tpu.memory_space<vmem>>, vector<8x256xf32>,
    } else {
    }
    return
  }
  func.func @transform_0(%arg0: i32, %arg1: i32) -> (i32, i32) {
    %c1_i32 = arith.constant 1 : i32
    %0 = arith.subi %c1_i32, %arg0 : i32
    %1 = arith.muli %arg1, %0 : i32
    %c0_i32 = arith.constant 0 : i32
    %c0_i32_0 = arith.constant 0 : i32
    return %1, %c0_i32 : i32, i32
  }
  func.func @transform_1(%arg0: i32, %arg1: i32) -> (i32, i32) {
    %c0_i32 = arith.constant 0 : i32
    %c0_i32_0 = arith.constant 0 : i32
    %c0_i32_1 = arith.constant 0 : i32
    return %c0_i32, %c0_i32_0 : i32, i32
  }
  func.func @transform_2(%arg0: i32, %arg1: i32) -> (i32, i32) {
    %c0_i32 = arith.constant 0 : i32
    %c0_i32_0 = arith.constant 0 : i32
    %c0_i32_1 = arith.constant 0 : i32
    return %c0_i32, %c0_i32_0 : i32, i32
  }
  func.func @transform_3(%arg0: i32, %arg1: i32) -> (i32, i32) {
    %c0_i32 = arith.constant 0 : i32
    %c0_i32_0 = arith.constant 0 : i32
    %c0_i32_1 = arith.constant 0 : i32
    return %c0_i32, %c0_i32_0 : i32, i32
  }
  func.func @transform_4(%arg0: i32, %arg1: i32) -> (i32, i32) {
    %c0_i32 = arith.constant 0 : i32
    %c0_i32_0 = arith.constant 0 : i32
    %c0_i32_1 = arith.constant 0 : i32
    return %c0_i32, %c0_i32_0 : i32, i32
  }
  func.func @transform_5(%arg0: i32, %arg1: i32) -> (i32, i32) {
    %0 = arith.muli %arg0, %arg1 : i32
    %c0_i32 = arith.constant 0 : i32
    %c0_i32_0 = arith.constant 0 : i32
    return %0, %c0_i32 : i32, i32
  }
}

</mosaic_0001>

<llo_original>
// kernel: tpu_custom_call.1
$region0: #{tpu_custom_call.1}
  #allocation0 [shape = 'u32[]', space=smem, size = 0x4, offset = 0x4, fixed_abs, tag = 'smem constant byte address 0x4 - core index']
  #allocation1 [shape = 'u32[144,128]{1,0:T(1,128)}', space=vmem, size = 0x12000, scoped, tag = 'internal scratch']
  #allocation2 [shape = 'f32[16,128]{1,0:T(8,128)}', space=vmem, size = 0x2000, scoped, tag = 'scratch operand']
  #allocation3 [shape = 'f32[2,128]{1,0:T(2,128)}', space=vmem, size = 0x400, scoped, tag = 'scratch operand']
  %s0 = inlined_call_operand.hbm [shape: f32[16,256], index: 0, kind: input, shape index: {}]
  %s1 = inlined_call_operand.hbm [shape: f32[256,128], index: 1, kind: input, shape index: {}]
  %s2 = inlined_call_operand.vmem [shape: f32[2,128], index: 2, kind: input, shape index: {}]
  %s3 = inlined_call_operand.hbm [shape: f32[128,256], index: 3, kind: input, shape index: {}]
  %s4 = inlined_call_operand.vmem [shape: f32[1,256], index: 4, kind: input, shape index: {}]
  %s5 = inlined_call_operand.hbm [shape: f32[16,256], index: 5, kind: output, shape index: {}]
  %s6 = sld [smem:[#allocation0]]
  $region81: #{tpu_custom_call.1} parent=0
    _
  %s8 = ssub.s32 1, %s6
  %s9 = scalar_select 0, %s8, %s6
  $region1: #{tpu_custom_call.1} parent=0
    #allocation4 [shape = 'u8[16384]{0}', space=vmem, size = 0x4000, scoped, tag = 'input window, operand 0']
    #allocation5 [shape = 's32[2]{0}', space=sflag, size = 0x8, scoped, tag = 'scoped memory for tpu_custom_call.1']
    #allocation6 [shape = 's32[2]{0}', space=sflag, size = 0x8, scoped, tag = 'scoped memory for tpu_custom_call.1']
    #allocation7 [shape = 'u8[131072]{0}', space=vmem, size = 0x20000, scoped, tag = 'input window, operand 1, single buffered']
    #allocation8 [shape = 's32[1]{0}', space=sflag, size = 0x4, scoped, tag = 'scoped memory for tpu_custom_call.1']
    #allocation9 [shape = 'u8[131072]{0}', space=vmem, size = 0x20000, scoped, tag = 'input window, operand 3, single buffered']
    #allocation10 [shape = 'u8[16384]{0}', space=vmem, size = 0x4000, scoped, tag = 'output window, operand 0']
    %10 = vsyncpa [#allocation5], 0
    %s11 = scalar_lea.sflag [#allocation5], 1
    %12 = vsyncpa %s11, 0
    %13 = vsyncpa [#allocation8], 0
    %14 = vsyncpa [#allocation6], 0
    %s15 = scalar_lea.sflag [#allocation6], 1
    %16 = vsyncpa %s15, 0
    loop: start=0, step=1, limit=6
    $region2: #{tpu_custom_call.1} parent=1 // loop_pre_header
      _
    $region3: #{tpu_custom_call.1} parent=1 // loop_header
      %s18 = sphi 0, %s22
      %p19 = scmp.ge.s32.totalorder %s18, 6
      %s25 = sphi 0, %s37
      %s26 = sphi 0, %s33
      %s27 = sphi 0, %s25
      %s28 = sphi 0, %s26
      %s29 = sphi 0, %s27
      %s30 = sphi 0, %s28
      %s44 = sphi 0, %s46
      %s47 = sphi 0, %s44
      %s48 = sphi 0, %s47
      %s64 = sphi 0, %s48
      %s68 = sphi 0, %s68
      %s70 = sphi 0, %s68
      %s71 = sphi 0, %s70
      %s85 = sphi 0, %s71
      %s89 = sphi 0, %s89
      %s91 = sphi 0, %s89
      %s92 = sphi 0, %s91
      %s106 = sphi 0, %s92
      %s110 = sphi 0, %s110
      %s112 = sphi 0, %s110
      %s113 = sphi 0, %s112
      %s127 = sphi 0, %s113
      %s131 = sphi 0, %s131
      %s133 = sphi 0, %s131
      %s134 = sphi 0, %s133
      %s148 = sphi 0, %s134
      %s156 = sphi 0, %s158
      %s159 = sphi 0, %s156
      %s160 = sphi 0, %s159
      %s176 = sphi 0, %s160
    $region4: #{tpu_custom_call.1} parent=1 // loop_header_branch
      %21 = sbr.rel (%p19) target = $region8
    $region5: #{tpu_custom_call.1} parent=1 // loop_body
      %s23 = ssub.s32 %s18, 1
      %s24 = ssub.s32 %s18, 2
      %s31 = sadd.s32 1, %s26
      %p32 = scmp.ge.s32.totalorder %s31, 2
      %s33 = scalar_select %p32, 0, %s31
      %s34 = sadd.s32 1, %s25
      %s35 = scalar_select %p32, %s34, %s25
      %p36 = scmp.ge.s32.totalorder %s35, 2
      %s37 = scalar_select %p36, 0, %s35
      %s38 = ssub.s32 1, %s25
      %s39 = smul.u32 %s26, %s38
      %s40 = ssub.s32 1, %s37
      %s41 = smul.u32 %s33, %s40
      %s42 = ssub.s32 %s39, %s41
      %p43 = scmp.eq.s32.totalorder %s42, 0
      %s45 = sadd.s32 %s44, 1
      %s46 = scalar_select %p43, %s44, %s45
      %p49 = pneg %p43
      %p50 = scmp.eq.s32.totalorder %s18, 3
      %p51 = por %p49, %p50
      %p52 = scmp.ne.s32.totalorder %s44, %s47
      %p53 = scmp.eq.s32.totalorder %s18, 0
      %p54 = por %p52, %p53
      %p55 = scmp.ne.s32.totalorder %s44, %s47
      %p56 = scmp.eq.s32.totalorder %s23, 3
      %p57 = por %p55, %p56
      %p58 = scmp.ne.s32.totalorder %s47, %s48
      %p59 = scmp.eq.s32.totalorder %s23, 0
      %p60 = por %p58, %p59
      %p61 = scmp.ne.s32.totalorder %s47, %s48
      %p62 = scmp.eq.s32.totalorder %s24, 3
      %p63 = por %p61, %p62
      %p65 = scmp.ne.s32.totalorder %s48, %s64
      %p66 = scmp.eq.s32.totalorder %s24, 0
      %p67 = por %p65, %p66
      %s69 = sadd.s32 %s68, 1
      %p72 = scmp.eq.s32.totalorder %s18, 3
      %p73 = scmp.ne.s32.totalorder %s68, %s70
      %p74 = scmp.eq.s32.totalorder %s18, 0
      %p75 = por %p73, %p74
      %p76 = scmp.ne.s32.totalorder %s68, %s70
      %p77 = scmp.eq.s32.totalorder %s23, 3
      %p78 = por %p76, %p77
      %p79 = scmp.ne.s32.totalorder %s70, %s71
      %p80 = scmp.eq.s32.totalorder %s23, 0
      %p81 = por %p79, %p80
      %p82 = scmp.ne.s32.totalorder %s70, %s71
      %p83 = scmp.eq.s32.totalorder %s24, 3
      %p84 = por %p82, %p83
      %p86 = scmp.ne.s32.totalorder %s71, %s85
      %p87 = scmp.eq.s32.totalorder %s24, 0
      %p88 = por %p86, %p87
      %s90 = sadd.s32 %s89, 1
      %p93 = scmp.eq.s32.totalorder %s18, 3
      %p94 = scmp.ne.s32.totalorder %s89, %s91
      %p95 = scmp.eq.s32.totalorder %s18, 0
      %p96 = por %p94, %p95
      %p97 = scmp.ne.s32.totalorder %s89, %s91
      %p98 = scmp.eq.s32.totalorder %s23, 3
      %p99 = por %p97, %p98
      %p100 = scmp.ne.s32.totalorder %s91, %s92
      %p101 = scmp.eq.s32.totalorder %s23, 0
      %p102 = por %p100, %p101
      %p103 = scmp.ne.s32.totalorder %s91, %s92
      %p104 = scmp.eq.s32.totalorder %s24, 3
      %p105 = por %p103, %p104
      %p107 = scmp.ne.s32.totalorder %s92, %s106
      %p108 = scmp.eq.s32.totalorder %s24, 0
      %p109 = por %p107, %p108
      %s111 = sadd.s32 %s110, 1
      %p114 = scmp.eq.s32.totalorder %s18, 3
      %p115 = scmp.ne.s32.totalorder %s110, %s112
      %p116 = scmp.eq.s32.totalorder %s18, 0
      %p117 = por %p115, %p116
      %p118 = scmp.ne.s32.totalorder %s110, %s112
      %p119 = scmp.eq.s32.totalorder %s23, 3
      %p120 = por %p118, %p119
      %p121 = scmp.ne.s32.totalorder %s112, %s113
      %p122 = scmp.eq.s32.totalorder %s23, 0
      %p123 = por %p121, %p122
      %p124 = scmp.ne.s32.totalorder %s112, %s113
      %p125 = scmp.eq.s32.totalorder %s24, 3
      %p126 = por %p124, %p125
      %p128 = scmp.ne.s32.totalorder %s113, %s127
      %p129 = scmp.eq.s32.totalorder %s24, 0
      %p130 = por %p128, %p129
      %s132 = sadd.s32 %s131, 1
      %p135 = scmp.eq.s32.totalorder %s18, 3
      %p136 = scmp.ne.s32.totalorder %s131, %s133
      %p137 = scmp.eq.s32.totalorder %s18, 0
      %p138 = por %p136, %p137
      %p139 = scmp.ne.s32.totalorder %s131, %s133
      %p140 = scmp.eq.s32.totalorder %s23, 3
      %p141 = por %p139, %p140
      %p142 = scmp.ne.s32.totalorder %s133, %s134
      %p143 = scmp.eq.s32.totalorder %s23, 0
      %p144 = por %p142, %p143
      %p145 = scmp.ne.s32.totalorder %s133, %s134
      %p146 = scmp.eq.s32.totalorder %s24, 3
      %p147 = por %p145, %p146
      %p149 = scmp.ne.s32.totalorder %s134, %s148
      %p150 = scmp.eq.s32.totalorder %s24, 0
      %p151 = por %p149, %p150
      %s152 = smul.u32 %s25, %s26
      %s153 = smul.u32 %s37, %s33
      %s154 = ssub.s32 %s152, %s153
      %p155 = scmp.eq.s32.totalorder %s154, 0
      %s157 = sadd.s32 %s156, 1
      %s158 = scalar_select %p155, %s156, %s157
      %p161 = pneg %p155
      %p162 = scmp.eq.s32.totalorder %s18, 3
      %p163 = por %p161, %p162
      %p164 = scmp.ne.s32.totalorder %s156, %s159
      %p165 = scmp.eq.s32.totalorder %s18, 0
      %p166 = por %p164, %p165
      %p167 = scmp.ne.s32.totalorder %s156, %s159
      %p168 = scmp.eq.s32.totalorder %s23, 3
      %p169 = por %p167, %p168
      %p170 = scmp.ne.s32.totalorder %s159, %s160
      %p171 = scmp.eq.s32.totalorder %s23, 0
      %p172 = por %p170, %p171
      %p173 = scmp.ne.s32.totalorder %s159, %s160
      %p174 = scmp.eq.s32.totalorder %s24, 3
      %p175 = por %p173, %p174
      %p177 = scmp.ne.s32.totalorder %s160, %s176
      %p178 = scmp.eq.s32.totalorder %s24, 0
      %p179 = por %p177, %p178
      %p180 = scmp.le.s32.totalorder 1, %s18
      %p181 = scmp.lt.s32.totalorder %s18, 5
      %p182 = pnand %p180, %p181
      %p183 = pneg %p182
      // Predicated region
      $region9: #{tpu_custom_call.1} parent=5 // pred_check
        _
      $region10: #{tpu_custom_call.1} parent=5 // pred_check_branch
        %185 = sbr.rel (%p182) target = $region12
      $region11: #{tpu_custom_call.1} parent=5 // pred_region
        %s186 = ssub.s32 %s18, 1
        // Predicated region
        $region13: #{tpu_custom_call.1} parent=11 // pred_check
          %p187 = pneg %p81
        $region14: #{tpu_custom_call.1} parent=11 // pred_check_branch
          %189 = sbr.rel (%p187) target = $region16
        $region15: #{tpu_custom_call.1} parent=11 // pred_region
          %s191 = ssub.s32 4096, 4096
          %192 = vsyncadd [#allocation8], %s191
          %s193 = sshll.u32 [#allocation7], 4
          %s194 = int_to_ptr.vmem [resolvable:$true] %s193
          %199 = dma.hbm_to_vmem [thread:$0]  %s1, 4096, %s194, [#allocation8], 128, 128, 8
        $region16: #{tpu_custom_call.1} parent=11 // pred_fallthru
          _
        // Predicated region
        $region17: #{tpu_custom_call.1} parent=11 // pred_check
          %p200 = pneg %p102
        $region18: #{tpu_custom_call.1} parent=11 // pred_check_branch
          %202 = sbr.rel (%p200) target = $region20
        $region19: #{tpu_custom_call.1} parent=11 // pred_region
          _
        $region20: #{tpu_custom_call.1} parent=11 // pred_fallthru
          _
        // Predicated region
        $region21: #{tpu_custom_call.1} parent=11 // pred_check
          %p203 = pneg %p123
        $region22: #{tpu_custom_call.1} parent=11 // pred_check_branch
          %205 = sbr.rel (%p203) target = $region24
        $region23: #{tpu_custom_call.1} parent=11 // pred_region
          %s207 = ssub.s32 4096, 4096
          %208 = vsyncadd [#allocation8], %s207
          %s209 = sshll.u32 [#allocation9], 4
          %s210 = int_to_ptr.vmem [resolvable:$true] %s209
          %215 = dma.hbm_to_vmem [thread:$0]  %s3, 4096, %s210, [#allocation8], 256, 256, 16
        $region24: #{tpu_custom_call.1} parent=11 // pred_fallthru
          _
        // Predicated region
        $region25: #{tpu_custom_call.1} parent=11 // pred_check
          %p216 = pneg %p144
        $region26: #{tpu_custom_call.1} parent=11 // pred_check_branch
          %218 = sbr.rel (%p216) target = $region28
        $region27: #{tpu_custom_call.1} parent=11 // pred_region
          _
        $region28: #{tpu_custom_call.1} parent=11 // pred_fallthru
          _
      $region12: #{tpu_custom_call.1} parent=5 // pred_fallthru
        _
      %p219 = scmp.lt.s32.totalorder %s18, 4
      // Predicated region
      $region29: #{tpu_custom_call.1} parent=5 // pred_check
        %p220 = pneg %p219
      $region30: #{tpu_custom_call.1} parent=5 // pred_check_branch
        %222 = sbr.rel (%p220) target = $region32
      $region31: #{tpu_custom_call.1} parent=5 // pred_region
        // Predicated region
        $region33: #{tpu_custom_call.1} parent=31 // pred_check
          %p223 = pneg %p54
        $region34: #{tpu_custom_call.1} parent=31 // pred_check_branch
          %225 = sbr.rel (%p223) target = $region36
        $region35: #{tpu_custom_call.1} parent=31 // pred_region
          %s226 = sand.u32 %s44, 1
          %s227 = scalar_lea.sflag [#allocation5], %s226
          %s228 = sand.u32 %s44, 1
          %s229 = smul.addr %s228, 16
          %s230 = scalar_lea.vmem [#allocation4], %s229
          %s231 = ssub.s32 1, %s25
          %s232 = smul.u32 %s26, %s231
          %s234 = ssub.s32 256, 256
          %235 = vsyncadd %s227, %s234
          %s236 = smul.addr %s232, 2
          %s237 = smul.addr %s236, 128
          %s238 = scalar_lea.hbm %s0, %s237
          %s240 = sshll.u32 %s230, 4
          %s241 = int_to_ptr.vmem [resolvable:$true] %s240
          %243 = dma.hbm_to_vmem [thread:$0]  %s238, 256, %s241, %s227
        $region36: #{tpu_custom_call.1} parent=31 // pred_fallthru
          _
      $region32: #{tpu_custom_call.1} parent=5 // pred_fallthru
        _
      %p244 = scmp.le.s32.totalorder 1, %s18
      %p245 = scmp.lt.s32.totalorder %s18, 5
      %p246 = pnand %p244, %p245
      %p247 = pneg %p246
      // Predicated region
      $region37: #{tpu_custom_call.1} parent=5 // pred_check
        _
      $region38: #{tpu_custom_call.1} parent=5 // pred_check_branch
        %249 = sbr.rel (%p246) target = $region40
      $region39: #{tpu_custom_call.1} parent=5 // pred_region
        %s250 = ssub.s32 %s18, 1
        %s251 = sand.u32 %s47, 1
        %s252 = scalar_lea.sflag [#allocation5], %s251
        %s253 = sand.u32 %s47, 1
        %s254 = smul.addr %s253, 16
        %s255 = scalar_lea.vmem [#allocation4], %s254
        // Predicated region
        $region41: #{tpu_custom_call.1} parent=39 // pred_check
          %p256 = pneg %p60
        $region42: #{tpu_custom_call.1} parent=39 // pred_check_branch
          %258 = sbr.rel (%p256) target = $region44
        $region43: #{tpu_custom_call.1} parent=39 // pred_region
          %259 = dma.done %s252, 256
        $region44: #{tpu_custom_call.1} parent=39 // pred_fallthru
          _
        // Predicated region
        $region45: #{tpu_custom_call.1} parent=39 // pred_check
          %p260 = pneg %p81
        $region46: #{tpu_custom_call.1} parent=39 // pred_check_branch
          %262 = sbr.rel (%p260) target = $region48
        $region47: #{tpu_custom_call.1} parent=39 // pred_region
          %263 = dma.done [#allocation8], 4096
        $region48: #{tpu_custom_call.1} parent=39 // pred_fallthru
          _
        // Predicated region
        $region49: #{tpu_custom_call.1} parent=39 // pred_check
          %p264 = pneg %p123
        $region50: #{tpu_custom_call.1} parent=39 // pred_check_branch
          %266 = sbr.rel (%p264) target = $region52
        $region51: #{tpu_custom_call.1} parent=39 // pred_region
          %267 = dma.done [#allocation8], 4096
        $region52: #{tpu_custom_call.1} parent=39 // pred_fallthru
          _
        %s268 = sand.u32 %s47, 1
        %s269 = scalar_lea.sflag [#allocation5], %s268
        %s270 = sand.u32 %s47, 1
        %s271 = smul.addr %s270, 16
        %s272 = scalar_lea.vmem [#allocation4], %s271
        %p273 = pneg %p60
        %p274 = pneg %p57
        %p275 = pneg %p81
        %p276 = pneg %p78
        %p277 = pneg %p102
        %p278 = pneg %p99
        %p279 = pneg %p123
        %p280 = pneg %p120
        %p281 = pneg %p144
        %p282 = pneg %p141
        %p283 = pneg %p172
        %p284 = pneg %p169
        %s285 = sand.u32 %s159, 1
        %s286 = scalar_lea.sflag [#allocation6], %s285
        %s287 = sand.u32 %s159, 1
        %s288 = smul.addr %s287, 16
        %s289 = scalar_lea.vmem [#allocation10], %s288
        %s290 = ssub.s32 1, %s27
        %s291 = smul.u32 %s28, %s290
        %s292 = smul.u32 %s27, %s28
        %s294 = smul.u32 %s28, 8
        %p295 = scmp.eq.s32.totalorder %s27, 0
        // Predicated region
        $region53: #{tpu_custom_call.1} parent=39 // pred_check
          %p296 = pneg %p295
        $region54: #{tpu_custom_call.1} parent=39 // pred_check_branch
          %298 = sbr.rel (%p296) target = $region56
        $region55: #{tpu_custom_call.1} parent=39 // pred_region
          %p299 = scmp.eq.s32.totalorder %s28, 0
          // Predicated region
          $region57: #{tpu_custom_call.1} parent=55 // pred_check
            %p300 = pneg %p299
          $region58: #{tpu_custom_call.1} parent=55 // pred_check_branch
            %302 = sbr.rel (%p300) target = $region60
          $region59: #{tpu_custom_call.1} parent=55 // pred_region
            %303 = vst [vmem:[#allocation3] sm:$0x3] 0.0
          $region60: #{tpu_custom_call.1} parent=55 // pred_fallthru
            _
          %v304 = vld [vmem:[%s255] sm:$0xff]
          %v305 = vld [vmem:[%s255 + $0x8] sm:$0xff]
          %v306 = vpack.c.bf16 %v304, %v304
          %v307 = vpack.c.bf16 %v305, %v305
          %v308 = vld [vmem:[#allocation7] sm:$0xff]
          %v309 = vld [vmem:[#allocation7 + $0x8] sm:$0xff]
          %v310 = vld [vmem:[#allocation7 + $0x10] sm:$0xff]
          %v311 = vld [vmem:[#allocation7 + $0x18] sm:$0xff]
          %v312 = vld [vmem:[#allocation7 + $0x20] sm:$0xff]
          %v313 = vld [vmem:[#allocation7 + $0x28] sm:$0xff]
          %v314 = vld [vmem:[#allocation7 + $0x30] sm:$0xff]
          %v315 = vld [vmem:[#allocation7 + $0x38] sm:$0xff]
          %v316 = vld [vmem:[#allocation7 + $0x40] sm:$0xff]
          %v317 = vld [vmem:[#allocation7 + $0x48] sm:$0xff]
          %v318 = vld [vmem:[#allocation7 + $0x50] sm:$0xff]
          %v319 = vld [vmem:[#allocation7 + $0x58] sm:$0xff]
          %v320 = vld [vmem:[#allocation7 + $0x60] sm:$0xff]
          %v321 = vld [vmem:[#allocation7 + $0x68] sm:$0xff]
          %v322 = vld [vmem:[#allocation7 + $0x70] sm:$0xff]
          %v323 = vld [vmem:[#allocation7 + $0x78] sm:$0xff]
          %v324 = vld [vmem:[#allocation7 + $0x80] sm:$0xff]
          %v325 = vld [vmem:[#allocation7 + $0x88] sm:$0xff]
          %v326 = vld [vmem:[#allocation7 + $0x90] sm:$0xff]
          %v327 = vld [vmem:[#allocation7 + $0x98] sm:$0xff]
          %v328 = vld [vmem:[#allocation7 + $0xa0] sm:$0xff]
          %v329 = vld [vmem:[#allocation7 + $0xa8] sm:$0xff]
          %v330 = vld [vmem:[#allocation7 + $0xb0] sm:$0xff]
          %v331 = vld [vmem:[#allocation7 + $0xb8] sm:$0xff]
          %v332 = vld [vmem:[#allocation7 + $0xc0] sm:$0xff]
          %v333 = vld [vmem:[#allocation7 + $0xc8] sm:$0xff]
          %v334 = vld [vmem:[#allocation7 + $0xd0] sm:$0xff]
          %v335 = vld [vmem:[#allocation7 + $0xd8] sm:$0xff]
          %v336 = vld [vmem:[#allocation7 + $0xe0] sm:$0xff]
          %v337 = vld [vmem:[#allocation7 + $0xe8] sm:$0xff]
          %v338 = vld [vmem:[#allocation7 + $0xf0] sm:$0xff]
          %v339 = vld [vmem:[#allocation7 + $0xf8] sm:$0xff]
          %v340 = vpack.c.bf16 %v309, %v308
          %v341 = vpack.c.bf16 %v311, %v310
          %v342 = vpack.c.bf16 %v313, %v312
          %v343 = vpack.c.bf16 %v315, %v314
          %v344 = vpack.c.bf16 %v317, %v316
          %v345 = vpack.c.bf16 %v319, %v318
          %v346 = vpack.c.bf16 %v321, %v320
          %v347 = vpack.c.bf16 %v323, %v322
          %v348 = vpack.c.bf16 %v325, %v324
          %v349 = vpack.c.bf16 %v327, %v326
          %v350 = vpack.c.bf16 %v329, %v328
          %v351 = vpack.c.bf16 %v331, %v330
          %v352 = vpack.c.bf16 %v333, %v332
          %v353 = vpack.c.bf16 %v335, %v334
          %v354 = vpack.c.bf16 %v337, %v336
          %v355 = vpack.c.bf16 %v339, %v338
          %356 = vmatprep.subr.bf16.mxu0 0
          %357 = vmatpush1.bf16.msra.mxu0 %v340
          %358 = vmatprep.subr.bf16.mxu0 0
          %359 = vmatpush1.bf16.msra.mxu0 %v341
          %360 = vmatprep.subr.bf16.mxu0 0
          %361 = vmatpush1.bf16.msra.mxu0 %v342
          %362 = vmatprep.subr.bf16.mxu0 0
          %363 = vmatpush1.bf16.msra.mxu0 %v343
          %364 = vmatprep.subr.bf16.mxu0 0
          %365 = vmatpush1.bf16.msra.mxu0 %v344
          %366 = vmatprep.subr.bf16.mxu0 0
          %367 = vmatpush1.bf16.msra.mxu0 %v345
          %368 = vmatprep.subr.bf16.mxu0 0
          %369 = vmatpush1.bf16.msra.mxu0 %v346
          %370 = vmatprep.subr.bf16.mxu0 0
          %371 = vmatpush1.bf16.msra.mxu0 %v347
          %372 = vmatprep.subr.bf16.mxu0 0
          %373 = vmatpush1.bf16.msra.mxu0 %v348
          %374 = vmatprep.subr.bf16.mxu0 0
          %375 = vmatpush1.bf16.msra.mxu0 %v349
          %376 = vmatprep.subr.bf16.mxu0 0
          %377 = vmatpush1.bf16.msra.mxu0 %v350
          %378 = vmatprep.subr.bf16.mxu0 0
          %379 = vmatpush1.bf16.msra.mxu0 %v351
          %380 = vmatprep.subr.bf16.mxu0 0
          %381 = vmatpush1.bf16.msra.mxu0 %v352
          %382 = vmatprep.subr.bf16.mxu0 0
          %383 = vmatpush1.bf16.msra.mxu0 %v353
          %384 = vmatprep.subr.bf16.mxu0 0
          %385 = vmatpush1.bf16.msra.mxu0 %v354
          %386 = vmatprep.subr.bf16.mxu0 0
          %387 = vmatpush1.bf16.msra.mxu0 %v355
          %388 = vmatprep.mubr.bf16.mxu0 %v307
          %389 = vmatmul.mubr.bf16.gmra.mrb[0].mxu0 %v306
          %v390 = vpop.f32.mrb[0].mxu0
          %v391 = vadd.f32 0.0, %v390
          %v392 = vpop.f32.mrb[0].mxu0
          %v393 = vpop.f32.mrb[0].mxu0
          %v394 = vpop.f32.mrb[0].mxu0
          %395 = vdwg.mxu0
          %s396 = scalar_lea.vmem [#allocation2], %s294
          %397 = vst [vmem:[%s396] sm:$0xff] %v391
          %v398 = vld [vmem:[#allocation3] sm:$0x1]
          %v399 = vrot.slane %v391, 4
          %v400 = vadd.f32 %v391, %v399
          %v401 = vrot.slane %v400, 2
          %v402 = vadd.f32 %v400, %v401
          %v403 = vrot.slane %v402, 1
          %v404 = vadd.f32 %v402, %v403
          %v405 = vadd.f32 %v398, %v404
          %406 = vst [vmem:[#allocation3] sm:$0x1] %v405
        $region56: #{tpu_custom_call.1} parent=39 // pred_fallthru
          _
        %p407 = scmp.eq.s32.totalorder %s27, 1
        // Predicated region
        $region61: #{tpu_custom_call.1} parent=39 // pred_check
          %p408 = pneg %p407
        $region62: #{tpu_custom_call.1} parent=39 // pred_check_branch
          %410 = sbr.rel (%p408) target = $region64
        $region63: #{tpu_custom_call.1} parent=39 // pred_region
          %p411 = scmp.eq.s32.totalorder %s28, 0
          // Predicated region
          $region65: #{tpu_custom_call.1} parent=63 // pred_check
            %p412 = pneg %p411
          $region66: #{tpu_custom_call.1} parent=63 // pred_check_branch
            %414 = sbr.rel (%p412) target = $region68
          $region67: #{tpu_custom_call.1} parent=63 // pred_region
            %v415 = vld [vmem:[#allocation3] sm:$0x1]
            %v416 = vmul.f32 %v415, 0.0625
            %v417 = vld [vmem:[#allocation2] sm:$0xff]
            %v418 = vld [vmem:[#allocation2 + $0x8] sm:$0xff]
            %v419 = vlaneseq
            %v420 = vshrl.u32 %v419, 7
            %v421 = vsub.s32 0, %v420
            %v422 = vrot.slane %v416, %v421
            %v423 = vsub.f32 %v417, %v422
            %v424 = vsub.f32 %v418, %v422
            %v425 = vmul.f32 %v423, %v423
            %v426 = vmul.f32 %v424, %v424
            %v427 = vadd.f32 %v425, %v426
            %v428 = vrot.slane %v427, 4
            %v429 = vadd.f32 %v427, %v428
            %v430 = vrot.slane %v429, 2
            %v431 = vadd.f32 %v429, %v430
            %v432 = vrot.slane %v431, 1
            %v433 = vadd.f32 %v431, %v432
            %v434 = vmul.f32 %v433, 0.0625
            %v435 = vld [vmem:[%s2] sm:$0x1]
            %v436 = vadd.f32 %v434, 1e-05
            %v437 = vrsqrt.pop %v436
            %v438 = vmul.f32 %v435, %v437
            %v439 = vld [vmem:[%s2 + $0x1] sm:$0x1]
            %v440 = vmul.f32 %v416, %v438
            %v441 = vsub.f32 %v439, %v440
            %442 = vst [vmem:[#allocation3] sm:$0x1] %v438
            %443 = vst [vmem:[#allocation3 + $0x1] sm:$0x1] %v441
          $region68: #{tpu_custom_call.1} parent=63 // pred_fallthru
            _
          %s444 = scalar_lea.vmem [#allocation2], %s294
          %v445 = vld [vmem:[%s444] sm:$0xff]
          %v446 = vld [vmem:[#allocation3] sm:$0x1]
          %v447 = vlaneseq
          %v448 = vshrl.u32 %v447, 7
          %v449 = vsub.s32 0, %v448
          %v450 = vrot.slane %v446, %v449
          %v451 = vmul.f32 %v445, %v450
          %v452 = vld [vmem:[#allocation3 + $0x1] sm:$0x1]
          %v453 = vlaneseq
          %v454 = vshrl.u32 %v453, 7
          %v455 = vsub.s32 0, %v454
          %v456 = vrot.slane %v452, %v455
          %v457 = vadd.f32 %v451, %v456
          %v458 = vmax.f32 %v457, 0.0
          %v459 = vpack.c.bf16 %v458, %v458
          %v460 = vld [vmem:[#allocation9] sm:$0xff]
          %v461 = vld [vmem:[#allocation9 + $0x8] sm:$0xff]
          %v462 = vld [vmem:[#allocation9 + $0x10] sm:$0xff]
          %v463 = vld [vmem:[#allocation9 + $0x18] sm:$0xff]
          %v464 = vld [vmem:[#allocation9 + $0x20] sm:$0xff]
          %v465 = vld [vmem:[#allocation9 + $0x28] sm:$0xff]
          %v466 = vld [vmem:[#allocation9 + $0x30] sm:$0xff]
          %v467 = vld [vmem:[#allocation9 + $0x38] sm:$0xff]
          %v468 = vld [vmem:[#allocation9 + $0x40] sm:$0xff]
          %v469 = vld [vmem:[#allocation9 + $0x48] sm:$0xff]
          %v470 = vld [vmem:[#allocation9 + $0x50] sm:$0xff]
          %v471 = vld [vmem:[#allocation9 + $0x58] sm:$0xff]
          %v472 = vld [vmem:[#allocation9 + $0x60] sm:$0xff]
          %v473 = vld [vmem:[#allocation9 + $0x68] sm:$0xff]
          %v474 = vld [vmem:[#allocation9 + $0x70] sm:$0xff]
          %v475 = vld [vmem:[#allocation9 + $0x78] sm:$0xff]
          %v476 = vld [vmem:[#allocation9 + $0x80] sm:$0xff]
          %v477 = vld [vmem:[#allocation9 + $0x88] sm:$0xff]
          %v478 = vld [vmem:[#allocation9 + $0x90] sm:$0xff]
          %v479 = vld [vmem:[#allocation9 + $0x98] sm:$0xff]
          %v480 = vld [vmem:[#allocation9 + $0xa0] sm:$0xff]
          %v481 = vld [vmem:[#allocation9 + $0xa8] sm:$0xff]
          %v482 = vld [vmem:[#allocation9 + $0xb0] sm:$0xff]
          %v483 = vld [vmem:[#allocation9 + $0xb8] sm:$0xff]
          %v484 = vld [vmem:[#allocation9 + $0xc0] sm:$0xff]
          %v485 = vld [vmem:[#allocation9 + $0xc8] sm:$0xff]
          %v486 = vld [vmem:[#allocation9 + $0xd0] sm:$0xff]
          %v487 = vld [vmem:[#allocation9 + $0xd8] sm:$0xff]
          %v488 = vld [vmem:[#allocation9 + $0xe0] sm:$0xff]
          %v489 = vld [vmem:[#allocation9 + $0xe8] sm:$0xff]
          %v490 = vld [vmem:[#allocation9 + $0xf0] sm:$0xff]
          %v491 = vld [vmem:[#allocation9 + $0xf8] sm:$0xff]
          %v492 = vpack.c.bf16 %v462, %v460
          %v493 = vpack.c.bf16 %v463, %v461
          %v494 = vpack.c.bf16 %v466, %v464
          %v495 = vpack.c.bf16 %v467, %v465
          %v496 = vpack.c.bf16 %v470, %v468
          %v497 = vpack.c.bf16 %v471, %v469
          %v498 = vpack.c.bf16 %v474, %v472
          %v499 = vpack.c.bf16 %v475, %v473
          %v500 = vpack.c.bf16 %v478, %v476
          %v501 = vpack.c.bf16 %v479, %v477
          %v502 = vpack.c.bf16 %v482, %v480
          %v503 = vpack.c.bf16 %v483, %v481
          %v504 = vpack.c.bf16 %v486, %v484
          %v505 = vpack.c.bf16 %v487, %v485
          %v506 = vpack.c.bf16 %v490, %v488
          %v507 = vpack.c.bf16 %v491, %v489
          %v508 = vld [vmem:[%s4] sm:$0x3]
          %v510 = vlaneseq
          %v511 = vshrl.u32 %v510, 7
          %v512 = vsub.s32 0, %v511
          %v513 = vrot.slane %v508, %v512
          %v514 = vlaneseq
          %v515 = vshrl.u32 %v514, 7
          %v516 = vsub.s32 1, %v515
          %v517 = vrot.slane %v508, %v516
          %520 = vmatprep.subr.bf16.mxu0 %v493
          %521 = vmatpush1.bf16.msra.mxu0 %v492
          %522 = vmatprep.subr.bf16.mxu0 %v495
          %523 = vmatpush1.bf16.msra.mxu0 %v494
          %524 = vmatprep.subr.bf16.mxu0 %v497
          %525 = vmatpush1.bf16.msra.mxu0 %v496
          %526 = vmatprep.subr.bf16.mxu0 %v499
          %527 = vmatpush1.bf16.msra.mxu0 %v498
          %528 = vmatprep.subr.bf16.mxu0 %v501
          %529 = vmatpush1.bf16.msra.mxu0 %v500
          %530 = vmatprep.subr.bf16.mxu0 %v503
          %531 = vmatpush1.bf16.msra.mxu0 %v502
          %532 = vmatprep.subr.bf16.mxu0 %v505
          %533 = vmatpush1.bf16.msra.mxu0 %v504
          %534 = vmatprep.subr.bf16.mxu0 %v507
          %535 = vmatpush1.bf16.msra.mxu0 %v506
          %536 = vmatprep.subr.bf16.mxu0 0
          %537 = vmatpush1.bf16.msra.mxu0 0
          %538 = vmatprep.subr.bf16.mxu0 0
          %539 = vmatpush1.bf16.msra.mxu0 0
          %540 = vmatprep.subr.bf16.mxu0 0
          %541 = vmatpush1.bf16.msra.mxu0 0
          %542 = vmatprep.subr.bf16.mxu0 0
          %543 = vmatpush1.bf16.msra.mxu0 0
          %544 = vmatprep.subr.bf16.mxu0 0
          %545 = vmatpush1.bf16.msra.mxu0 0
          %546 = vmatprep.subr.bf16.mxu0 0
          %547 = vmatpush1.bf16.msra.mxu0 0
          %548 = vmatprep.subr.bf16.mxu0 0
          %549 = vmatpush1.bf16.msra.mxu0 0
          %550 = vmatprep.subr.bf16.mxu0 0
          %551 = vmatpush1.bf16.msra.mxu0 0
          %552 = vmatprep.mubr.bf16.mxu0 0
          %553 = vmatmul.mubr.bf16.gmra.mrb[0].mxu0 %v459
          %v554 = vpop.f32.mrb[0].mxu0
          %v555 = vadd.f32 %v513, %v554
          %v556 = vpop.f32.mrb[0].mxu0
          %v557 = vadd.f32 %v517, %v556
          %v558 = vpop.f32.mrb[0].mxu0
          %v559 = vpop.f32.mrb[0].mxu0
          %560 = vdwg.mxu0
          %561 = vst [vmem:[%s289] sm:$0xff] %v555
          %562 = vst [vmem:[%s289 + $0x8] sm:$0xff] %v557
        $region64: #{tpu_custom_call.1} parent=39 // pred_fallthru
          _
        %s563 = sand.u32 %s159, 1
        %s564 = scalar_lea.sflag [#allocation6], %s563
        %s565 = sand.u32 %s159, 1
        %s566 = smul.addr %s565, 16
        %s567 = scalar_lea.vmem [#allocation10], %s566
        // Predicated region
        $region69: #{tpu_custom_call.1} parent=39 // pred_check
          %p568 = pneg %p169
        $region70: #{tpu_custom_call.1} parent=39 // pred_check_branch
          %570 = sbr.rel (%p568) target = $region72
        $region71: #{tpu_custom_call.1} parent=39 // pred_region
          %s571 = smul.u32 %s27, %s28
          %s573 = ssub.s32 256, 256
          %574 = vsyncadd %s564, %s573
          %s575 = smul.addr %s571, 2
          %s576 = smul.addr %s575, 128
          %s577 = scalar_lea.hbm %s5, %s576
          %s579 = sshll.u32 %s567, 4
          %s580 = int_to_ptr.vmem [resolvable:$true] %s579
          %582 = dma.vmem_to_hbm [thread:$0]  %s580, 256, %s577, %s564
        $region72: #{tpu_custom_call.1} parent=39 // pred_fallthru
          _
      $region40: #{tpu_custom_call.1} parent=5 // pred_fallthru
        _
      %p583 = scmp.le.s32.totalorder 2, %s18
      // Predicated region
      $region73: #{tpu_custom_call.1} parent=5 // pred_check
        %p584 = pneg %p583
      $region74: #{tpu_custom_call.1} parent=5 // pred_check_branch
        %586 = sbr.rel (%p584) target = $region76
      $region75: #{tpu_custom_call.1} parent=5 // pred_region
        %s587 = ssub.s32 %s18, 2
        // Predicated region
        $region77: #{tpu_custom_call.1} parent=75 // pred_check
          %p588 = pneg %p175
        $region78: #{tpu_custom_call.1} parent=75 // pred_check_branch
          %590 = sbr.rel (%p588) target = $region80
        $region79: #{tpu_custom_call.1} parent=75 // pred_region
          %s591 = sand.u32 %s160, 1
          %s592 = scalar_lea.sflag [#allocation6], %s591
          %s593 = sand.u32 %s160, 1
          %s594 = smul.addr %s593, 16
          %s595 = scalar_lea.vmem [#allocation10], %s594
          %596 = dma.done %s592, 256
        $region80: #{tpu_custom_call.1} parent=75 // pred_fallthru
          _
      $region76: #{tpu_custom_call.1} parent=5 // pred_fallthru
        _
    $region6: #{tpu_custom_call.1} parent=1 // loop_footer
      %s22 = sadd.s32 1, %s18
    $region7: #{tpu_custom_call.1} parent=1 // loop_footer_branch
      %17 = sbr.rel target = $region3
    $region8: #{tpu_custom_call.1} parent=1 // loop_exit
      _
    %597 = vsyncpa [#allocation5], 1
    %s598 = scalar_lea.sflag [#allocation5], 1
    %599 = vsyncpa %s598, 1
    %600 = vsyncpa [#allocation8], 1
    %601 = vsyncpa [#allocation6], 1
    %s602 = scalar_lea.sflag [#allocation6], 1
    %603 = vsyncpa %s602, 1

</llo_original>
